<compile_context>
chip_gen: v7x
topology: tpu7x:2x2x1
jax: 0.10.0
libtpu: 0.0.40
codegen_flags: <defaults>
</compile_context>

<pallas_src>
import math
import functools

import jax
import jax.numpy as jnp
import numpy as np
from jax.experimental import pallas as pl
from jax.experimental.pallas import tpu as pltpu


def _gat_kernel(h_ref, w_ref, a_ref, o_ref, *, alpha):
    # h_ref: (N, Fin) for the current batch element, w_ref: (Fin, Fout),
    # a_ref: (2, Fout) with row 0 = a1^T, row 1 = a2^T, o_ref: (N, Fout).

    # One MXU matmul per batch element.
    Wh = jnp.dot(h_ref[...], w_ref[...],
                 preferred_element_type=jnp.float32)            # (N, Fout)

    a1_row = a_ref[0:1, :]                                      # (1, Fout)
    a2_row = a_ref[1:2, :]                                      # (1, Fout)

    # Wh @ a1 and Wh @ a2 as columns: VPU multiply + cross-lane reduce
    # (no width-1 MXU pushes).
    Wh1 = jnp.sum(Wh * a1_row, axis=-1, keepdims=True)          # (N, 1)
    Wh2 = jnp.sum(Wh * a2_row, axis=-1, keepdims=True)          # (N, 1)
    Wh2_row = Wh2.T                                             # (1, N)  tiny XLU transpose

    e = Wh1 + Wh2_row                                           # (N, N)
    e = jnp.where(e > 0, e, alpha * e)                          # LeakyReLU(alpha)
    s = jax.nn.sigmoid(e)                                       # EUP

    # Softmax over torch dim=1 (rows).  sigmoid output is in (0,1), so exp() is
    # bounded in (1, e) and the usual max-subtraction is unnecessary.
    p = jnp.exp(s)                                              # (N, N), EUP
    denom = jnp.sum(p, axis=0, keepdims=True)                   # (1, N)
    inv = pl.reciprocal(denom, approx=False)                    # exact for 1e-5 check

    # Fold the normalization into Wh (N*Fout mults) instead of scaling p (N^2):
    #   hp[i,f] = sum_j p[i,j] * Wh[j,f] / denom[j]
    Wh_scaled = Wh * inv.T                                      # (N, Fout)
    hp = jnp.dot(p, Wh_scaled, preferred_element_type=jnp.float32)   # (N, Fout)

    # ELU (concat=True).  Clamp the exp argument so the unselected branch of the
    # where never overflows for large positive hp.
    out = jnp.where(hp > 0, hp, jnp.exp(jnp.minimum(hp, 0.0)) - 1.0)

    o_ref[...] = out.astype(o_ref.dtype)


def spatial_attention_pallas(h, W, a, alpha):
    """h: (B, N, Fin) f32, W: (Fin, Fout) f32, a: (2*Fout, 1) f32."""
    B, N, Fin = h.shape
    Fout = W.shape[1]

    # Fuse a1/a2 into one (2, Fout) array (row 0 = a1^T, row 1 = a2^T).
    a12t = a.reshape(2, Fout)

    kernel = functools.partial(_gat_kernel, alpha=alpha)

    # Grid over the batch so Pallas double-buffers per-batch DMAs against compute
    # and the v7x megacore can shard batches across TensorCores.
    # TODO(synk): for large N add flash-style tiling over the softmax (dim=1) axis
    # so the (N, N) score tile stays inside the per-generation VMEM budget.
    return pl.pallas_call(
        kernel,
        out_shape=jax.ShapeDtypeStruct((B, N, Fout), h.dtype),
        grid_spec=pltpu.PrefetchScalarGridSpec(
            num_scalar_prefetch=0,
            grid=(B,),
            in_specs=[
                pl.BlockSpec((None, N, Fin), lambda b: (b, 0, 0)),   # per-batch rows
                pl.BlockSpec((Fin, Fout), lambda b: (0, 0)),         # weights resident
                pl.BlockSpec((2, Fout), lambda b: (0, 0)),           # a1/a2 resident
            ],
            out_specs=pl.BlockSpec((None, N, Fout), lambda b: (b, 0, 0)),
        ),
        compiler_params=pltpu.CompilerParams(
            dimension_semantics=("parallel",),
            # Above the 32 MiB scoped default (v6e), with headroom below v7x's
            # 64 MiB physical VMEM; double-buffered tiles here are tiny anyway.
            vmem_limit_bytes=48 * 1024 * 1024,
        ),
    )(h, W, a12t)


def _xavier_uniform(key, shape, gain):
    fan_in, fan_out = shape[0], shape[1]
    limit = gain * math.sqrt(6.0 / (fan_in + fan_out))
    return jax.random.uniform(key, shape, minval=-limit, maxval=limit,
                              dtype=jnp.float32)


def _reference(h, W, a, alpha):
    # Pure-JAX reference mirroring the PyTorch forward exactly.
    Fout = W.shape[1]
    Wh = jnp.matmul(h, W)
    Wh1 = jnp.matmul(Wh, a[:Fout, :])                  # (B, N, 1)
    Wh2 = jnp.matmul(Wh, a[Fout:, :])                  # (B, N, 1)
    e = Wh1 + jnp.transpose(Wh2, (0, 2, 1))            # (B, N, N)
    e = jnp.where(e > 0, e, alpha * e)                 # LeakyReLU
    att = jax.nn.sigmoid(e)
    att = jax.nn.softmax(att, axis=1)                  # torch dim=1
    hp = jnp.matmul(att, Wh)
    return jnp.where(hp > 0, hp, jnp.exp(hp) - 1.0)    # ELU


if __name__ == "__main__":
    B, N = 2, 16
    in_features, out_features = 8, 16
    alpha = 0.2

    key = jax.random.PRNGKey(0)
    k_h, k_w, k_a = jax.random.split(key, 3)

    h = jax.random.normal(k_h, (B, N, in_features), dtype=jnp.float32)
    W = _xavier_uniform(k_w, (in_features, out_features), gain=1.414)
    a = _xavier_uniform(k_a, (2 * out_features, 1), gain=1.414)

    out = spatial_attention_pallas(h, W, a, alpha)
    out = jax.block_until_ready(out)

    ref = jax.block_until_ready(_reference(h, W, a, alpha))
    assert out.shape == (B, N, out_features)
    assert np.allclose(np.asarray(out), np.asarray(ref), rtol=1e-5, atol=1e-5)

    print("KERNEL_OK")
</pallas_src>

<mosaic_0001>
module attributes {stable_mosaic.version = 11 : i64} {
  func.func @_gat_kernel(%arg0: i32, %arg1: memref<1x16x8xf32, #tpu.memory_space<vmem>>, %arg2: memref<8x16xf32, #tpu.memory_space<vmem>>, %arg3: memref<2x16xf32, #tpu.memory_space<vmem>>, %arg4: memref<1x16x16xf32, #tpu.memory_space<vmem>>) attributes {dimension_semantics = [#tpu.dimension_semantics<parallel>], iteration_bounds = array<i64: 2>, scalar_prefetch = 0 : i64, scratch_operands = 0 : i64, tpu.core_type = #tpu.core_type<tc>, window_params = [{transform_indices = @transform_0, window_bounds = array<i64: 1, 16, 8>}, {pipeline_mode = #tpu.pipeline_mode<synchronous>, transform_indices = @transform_1, window_bounds = array<i64: 8, 16>}, {pipeline_mode = #tpu.pipeline_mode<synchronous>, transform_indices = @transform_2, window_bounds = array<i64: 2, 16>}, {transform_indices = @transform_3, window_bounds = array<i64: 1, 16, 16>}]} {
    %c0 = arith.constant 0 : index
    %c0_0 = arith.constant 0 : index
    %c0_1 = arith.constant 0 : index
    %0 = vector.load %arg1[%c0, %c0_0, %c0_1] : memref<1x16x8xf32, #tpu.memory_space<vmem>>, vector<1x16x8xf32>
    %1 = vector.shape_cast %0 : vector<1x16x8xf32> to vector<16x8xf32>
    %c0_2 = arith.constant 0 : index
    %c0_3 = arith.constant 0 : index
    %2 = vector.load %arg2[%c0_2, %c0_3] : memref<8x16xf32, #tpu.memory_space<vmem>>, vector<8x16xf32>
    %cst = arith.constant dense<0.000000e+00> : vector<16x16xf32>
    %3 = tpu.matmul %1, %2, %cst {dimension_numbers = #tpu.dot_dimension_numbers<[1], [0], [0], [1], [0, 0, 1, 1], [], []>} : vector<16x8xf32>, vector<8x16xf32>, vector<16x16xf32> -> vector<16x16xf32>
    %c0_4 = arith.constant 0 : index
    %c0_5 = arith.constant 0 : index
    %4 = vector.load %arg3[%c0_4, %c0_5] : memref<2x16xf32, #tpu.memory_space<vmem>>, vector<1x16xf32>
    %c1 = arith.constant 1 : index
    %c0_6 = arith.constant 0 : index
    %5 = vector.load %arg3[%c1, %c0_6] : memref<2x16xf32, #tpu.memory_space<vmem>>, vector<1x16xf32>
    %6 = vector.broadcast %4 : vector<1x16xf32> to vector<16x16xf32>
    %7 = arith.mulf %3, %6 : vector<16x16xf32>
    %cst_7 = arith.constant dense<0.000000e+00> : vector<16xf32>
    %8 = vector.multi_reduction <add>, %7, %cst_7 [1] : vector<16x16xf32> to vector<16xf32>
    %9 = vector.shape_cast %8 : vector<16xf32> to vector<16x1xf32>
    %10 = vector.broadcast %5 : vector<1x16xf32> to vector<16x16xf32>
    %11 = arith.mulf %3, %10 : vector<16x16xf32>
    %cst_8 = arith.constant dense<0.000000e+00> : vector<16xf32>
    %12 = vector.multi_reduction <add>, %11, %cst_8 [1] : vector<16x16xf32> to vector<16xf32>
    %13 = vector.shape_cast %12 : vector<16xf32> to vector<16x1xf32>
    %14 = tpu.transpose %13, [1, 0] : vector<16x1xf32> -> vector<1x16xf32>
    %15 = vector.broadcast %9 : vector<16x1xf32> to vector<16x16xf32>
    %16 = vector.broadcast %14 : vector<1x16xf32> to vector<16x16xf32>
    %17 = arith.addf %15, %16 : vector<16x16xf32>
    %cst_9 = arith.constant 0.000000e+00 : f32
    %18 = vector.broadcast %cst_9 : f32 to vector<16x16xf32>
    %19 = arith.cmpf ogt, %17, %18 : vector<16x16xf32>
    %cst_10 = arith.constant 2.000000e-01 : f32
    %20 = vector.broadcast %cst_10 : f32 to vector<16x16xf32>
    %21 = arith.mulf %20, %17 : vector<16x16xf32>
    %22 = arith.select %19, %17, %21 : vector<16x16xi1>, vector<16x16xf32>
    %23 = arith.negf %22 : vector<16x16xf32>
    %24 = math.exp %23 : vector<16x16xf32>
    %cst_11 = arith.constant 1.000000e+00 : f32
    %25 = vector.broadcast %cst_11 : f32 to vector<16x16xf32>
    %26 = arith.addf %25, %24 : vector<16x16xf32>
    %27 = arith.divf %25, %26 : vector<16x16xf32>
    %28 = math.exp %27 : vector<16x16xf32>
    %cst_12 = arith.constant dense<0.000000e+00> : vector<16xf32>
    %29 = vector.multi_reduction <add>, %28, %cst_12 [0] : vector<16x16xf32> to vector<16xf32>
    %30 = vector.shape_cast %29 : vector<16xf32> to vector<1x16xf32>
    %31 = tpu.reciprocal %30 : vector<1x16xf32> -> vector<1x16xf32>
    %32 = tpu.transpose %31, [1, 0] : vector<1x16xf32> -> vector<16x1xf32>
    %33 = vector.broadcast %32 : vector<16x1xf32> to vector<16x16xf32>
    %34 = arith.mulf %3, %33 : vector<16x16xf32>
    %cst_13 = arith.constant dense<0.000000e+00> : vector<16x16xf32>
    %35 = tpu.matmul %28, %34, %cst_13 {dimension_numbers = #tpu.dot_dimension_numbers<[1], [0], [0], [1], [0, 0, 1, 1], [], []>} : vector<16x16xf32>, vector<16x16xf32>, vector<16x16xf32> -> vector<16x16xf32>
    %cst_14 = arith.constant 0.000000e+00 : f32
    %36 = vector.broadcast %cst_14 : f32 to vector<16x16xf32>
    %37 = arith.cmpf ogt, %35, %36 : vector<16x16xf32>
    %cst_15 = arith.constant 0.000000e+00 : f32
    %38 = vector.broadcast %cst_15 : f32 to vector<16x16xf32>
    %39 = arith.minimumf %35, %38 : vector<16x16xf32>
    %40 = math.exp %39 : vector<16x16xf32>
    %cst_16 = arith.constant 1.000000e+00 : f32
    %41 = vector.broadcast %cst_16 : f32 to vector<16x16xf32>
    %42 = arith.subf %40, %41 : vector<16x16xf32>
    %43 = arith.select %37, %35, %42 : vector<16x16xi1>, vector<16x16xf32>
    %c0_17 = arith.constant 0 : index
    %c0_18 = arith.constant 0 : index
    %c0_19 = arith.constant 0 : index
    %44 = vector.load %arg4[%c0_17, %c0_18, %c0_19] : memref<1x16x16xf32, #tpu.memory_space<vmem>>, vector<1x16x16xf32>
    %45 = vector.shape_cast %44 : vector<1x16x16xf32> to vector<16x16xf32>
    %46 = vector.shape_cast %43 : vector<16x16xf32> to vector<1x16x16xf32>
    tpu.vector_store %arg4[%c0_17, %c0_18, %c0_19], %46 {strides = array<i32>} : memref<1x16x16xf32, #tpu.memory_space<vmem>>, vector<1x16x16xf32>,
    return
  }
  func.func @transform_0(%arg0: i32) -> (i32, i32, i32) {
    %c0_i32 = arith.constant 0 : i32
    %c0_i32_0 = arith.constant 0 : i32
    %c0_i32_1 = arith.constant 0 : i32
    return %arg0, %c0_i32, %c0_i32_0 : i32, i32, i32
  }
  func.func @transform_1(%arg0: i32) -> (i32, i32) {
    %c0_i32 = arith.constant 0 : i32
    %c0_i32_0 = arith.constant 0 : i32
    %c0_i32_1 = arith.constant 0 : i32
    return %c0_i32, %c0_i32_0 : i32, i32
  }
  func.func @transform_2(%arg0: i32) -> (i32, i32) {
    %c0_i32 = arith.constant 0 : i32
    %c0_i32_0 = arith.constant 0 : i32
    %c0_i32_1 = arith.constant 0 : i32
    return %c0_i32, %c0_i32_0 : i32, i32
  }
  func.func @transform_3(%arg0: i32) -> (i32, i32, i32) {
    %c0_i32 = arith.constant 0 : i32
    %c0_i32_0 = arith.constant 0 : i32
    %c0_i32_1 = arith.constant 0 : i32
    return %arg0, %c0_i32, %c0_i32_0 : i32, i32, i32
  }
}

</mosaic_0001>

<llo_original>
// kernel: tpu_custom_call.1
$region0: #{tpu_custom_call.1}
  #allocation0 [shape = 'u32[]', space=smem, size = 0x4, offset = 0x4, fixed_abs, tag = 'smem constant byte address 0x4 - core index']
  #allocation1 [shape = 'u32[144,128]{1,0:T(1,128)}', space=vmem, size = 0x12000, scoped, tag = 'internal scratch']
  %s0 = inlined_call_operand.vmem [shape: f32[2,16,8], index: 0, kind: input, shape index: {}]
  %s1 = inlined_call_operand.vmem [shape: f32[8,16], index: 1, kind: input, shape index: {}]
  %s2 = inlined_call_operand.vmem [shape: f32[2,16], index: 2, kind: input, shape index: {}]
  %s3 = inlined_call_operand.hbm [shape: f32[2,16,16], index: 3, kind: output, shape index: {}]
  %s4 = sld [smem:[#allocation0]]
  $region45: #{tpu_custom_call.1} parent=0
    _
  %s6 = ssub.s32 1, %s4
  %s7 = scalar_select 0, %s6, %s4
  $region1: #{tpu_custom_call.1} parent=0
    #allocation2 [shape = 'u8[16384]{0}', space=vmem, size = 0x4000, scoped, tag = 'output window, operand 0']
    #allocation3 [shape = 's32[2]{0}', space=sflag, size = 0x8, scoped, tag = 'scoped memory for tpu_custom_call.1']
    %8 = vsyncpa [#allocation3], 0
    %s9 = scalar_lea.sflag [#allocation3], 1
    %10 = vsyncpa %s9, 0
    loop: start=0, step=1, limit=4
    $region2: #{tpu_custom_call.1} parent=1 // loop_pre_header
      _
    $region3: #{tpu_custom_call.1} parent=1 // loop_header
      %s12 = sphi 0, %s16
      %p13 = scmp.ge.s32.totalorder %s12, 4
      %s22 = sphi 0, %s24
      %s25 = sphi 0, %s22
      %s26 = sphi 0, %s25
      %s42 = sphi 0, %s26
      %s46 = sphi 0, %s46
      %s48 = sphi 0, %s46
      %s49 = sphi 0, %s48
      %s63 = sphi 0, %s49
      %s67 = sphi 0, %s67
      %s69 = sphi 0, %s67
      %s70 = sphi 0, %s69
      %s84 = sphi 0, %s70
      %s90 = sphi 0, %s92
      %s93 = sphi 0, %s90
      %s94 = sphi 0, %s93
      %s110 = sphi 0, %s94
    $region4: #{tpu_custom_call.1} parent=1 // loop_header_branch
      %15 = sbr.rel (%p13) target = $region8
    $region5: #{tpu_custom_call.1} parent=1 // loop_body
      %s17 = ssub.s32 %s12, 1
      %s18 = ssub.s32 %s12, 2
      %s19 = sadd.s32 %s12, 1
      %s20 = ssub.s32 %s12, %s19
      %p21 = scmp.eq.s32.totalorder %s20, 0
      %s23 = sadd.s32 %s22, 1
      %s24 = scalar_select %p21, %s22, %s23
      %p27 = pneg %p21
      %p28 = scmp.eq.s32.totalorder %s12, 1
      %p29 = por %p27, %p28
      %p30 = scmp.ne.s32.totalorder %s22, %s25
      %p31 = scmp.eq.s32.totalorder %s12, 0
      %p32 = por %p30, %p31
      %p33 = scmp.ne.s32.totalorder %s22, %s25
      %p34 = scmp.eq.s32.totalorder %s17, 1
      %p35 = por %p33, %p34
      %p36 = scmp.ne.s32.totalorder %s25, %s26
      %p37 = scmp.eq.s32.totalorder %s17, 0
      %p38 = por %p36, %p37
      %p39 = scmp.ne.s32.totalorder %s25, %s26
      %p40 = scmp.eq.s32.totalorder %s18, 1
      %p41 = por %p39, %p40
      %p43 = scmp.ne.s32.totalorder %s26, %s42
      %p44 = scmp.eq.s32.totalorder %s18, 0
      %p45 = por %p43, %p44
      %s47 = sadd.s32 %s46, 1
      %p50 = scmp.eq.s32.totalorder %s12, 1
      %p51 = scmp.ne.s32.totalorder %s46, %s48
      %p52 = scmp.eq.s32.totalorder %s12, 0
      %p53 = por %p51, %p52
      %p54 = scmp.ne.s32.totalorder %s46, %s48
      %p55 = scmp.eq.s32.totalorder %s17, 1
      %p56 = por %p54, %p55
      %p57 = scmp.ne.s32.totalorder %s48, %s49
      %p58 = scmp.eq.s32.totalorder %s17, 0
      %p59 = por %p57, %p58
      %p60 = scmp.ne.s32.totalorder %s48, %s49
      %p61 = scmp.eq.s32.totalorder %s18, 1
      %p62 = por %p60, %p61
      %p64 = scmp.ne.s32.totalorder %s49, %s63
      %p65 = scmp.eq.s32.totalorder %s18, 0
      %p66 = por %p64, %p65
      %s68 = sadd.s32 %s67, 1
      %p71 = scmp.eq.s32.totalorder %s12, 1
      %p72 = scmp.ne.s32.totalorder %s67, %s69
      %p73 = scmp.eq.s32.totalorder %s12, 0
      %p74 = por %p72, %p73
      %p75 = scmp.ne.s32.totalorder %s67, %s69
      %p76 = scmp.eq.s32.totalorder %s17, 1
      %p77 = por %p75, %p76
      %p78 = scmp.ne.s32.totalorder %s69, %s70
      %p79 = scmp.eq.s32.totalorder %s17, 0
      %p80 = por %p78, %p79
      %p81 = scmp.ne.s32.totalorder %s69, %s70
      %p82 = scmp.eq.s32.totalorder %s18, 1
      %p83 = por %p81, %p82
      %p85 = scmp.ne.s32.totalorder %s70, %s84
      %p86 = scmp.eq.s32.totalorder %s18, 0
      %p87 = por %p85, %p86
      %s88 = ssub.s32 %s12, %s19
      %p89 = scmp.eq.s32.totalorder %s88, 0
      %s91 = sadd.s32 %s90, 1
      %s92 = scalar_select %p89, %s90, %s91
      %p95 = pneg %p89
      %p96 = scmp.eq.s32.totalorder %s12, 1
      %p97 = por %p95, %p96
      %p98 = scmp.ne.s32.totalorder %s90, %s93
      %p99 = scmp.eq.s32.totalorder %s12, 0
      %p100 = por %p98, %p99
      %p101 = scmp.ne.s32.totalorder %s90, %s93
      %p102 = scmp.eq.s32.totalorder %s17, 1
      %p103 = por %p101, %p102
      %p104 = scmp.ne.s32.totalorder %s93, %s94
      %p105 = scmp.eq.s32.totalorder %s17, 0
      %p106 = por %p104, %p105
      %p107 = scmp.ne.s32.totalorder %s93, %s94
      %p108 = scmp.eq.s32.totalorder %s18, 1
      %p109 = por %p107, %p108
      %p111 = scmp.ne.s32.totalorder %s94, %s110
      %p112 = scmp.eq.s32.totalorder %s18, 0
      %p113 = por %p111, %p112
      %p114 = scmp.le.s32.totalorder 1, %s12
      %p115 = scmp.lt.s32.totalorder %s12, 3
      %p116 = pnand %p114, %p115
      %p117 = pneg %p116
      // Predicated region
      $region9: #{tpu_custom_call.1} parent=5 // pred_check
        _
      $region10: #{tpu_custom_call.1} parent=5 // pred_check_branch
        %119 = sbr.rel (%p116) target = $region12
      $region11: #{tpu_custom_call.1} parent=5 // pred_region
        %s120 = ssub.s32 %s12, 1
        // Predicated region
        $region13: #{tpu_custom_call.1} parent=11 // pred_check
          %p121 = pneg %p59
        $region14: #{tpu_custom_call.1} parent=11 // pred_check_branch
          %123 = sbr.rel (%p121) target = $region16
        $region15: #{tpu_custom_call.1} parent=11 // pred_region
          _
        $region16: #{tpu_custom_call.1} parent=11 // pred_fallthru
          _
        // Predicated region
        $region17: #{tpu_custom_call.1} parent=11 // pred_check
          %p124 = pneg %p80
        $region18: #{tpu_custom_call.1} parent=11 // pred_check_branch
          %126 = sbr.rel (%p124) target = $region20
        $region19: #{tpu_custom_call.1} parent=11 // pred_region
          _
        $region20: #{tpu_custom_call.1} parent=11 // pred_fallthru
          _
      $region12: #{tpu_custom_call.1} parent=5 // pred_fallthru
        _
      %p127 = scmp.lt.s32.totalorder %s12, 2
      // Predicated region
      $region21: #{tpu_custom_call.1} parent=5 // pred_check
        %p128 = pneg %p127
      $region22: #{tpu_custom_call.1} parent=5 // pred_check_branch
        %130 = sbr.rel (%p128) target = $region24
      $region23: #{tpu_custom_call.1} parent=5 // pred_region
        // Predicated region
        $region25: #{tpu_custom_call.1} parent=23 // pred_check
          %p131 = pneg %p32
        $region26: #{tpu_custom_call.1} parent=23 // pred_check_branch
          %133 = sbr.rel (%p131) target = $region28
        $region27: #{tpu_custom_call.1} parent=23 // pred_region
          %p134 = scmp.lt.s32.totalorder %s12, 1
          %s135 = scalar_select %p134, %s12, 1
          %s136 = smul.addr %s135, 2
          %s137 = smul.addr %s136, 8
          %s138 = scalar_lea.vmem %s0, %s137
        $region28: #{tpu_custom_call.1} parent=23 // pred_fallthru
          _
      $region24: #{tpu_custom_call.1} parent=5 // pred_fallthru
        _
      %p139 = scmp.le.s32.totalorder 1, %s12
      %p140 = scmp.lt.s32.totalorder %s12, 3
      %p141 = pnand %p139, %p140
      %p142 = pneg %p141
      // Predicated region
      $region29: #{tpu_custom_call.1} parent=5 // pred_check
        _
      $region30: #{tpu_custom_call.1} parent=5 // pred_check_branch
        %144 = sbr.rel (%p141) target = $region32
      $region31: #{tpu_custom_call.1} parent=5 // pred_region
        %s145 = ssub.s32 %s12, 1
        %p146 = scmp.lt.s32.totalorder %s17, 1
        %s147 = scalar_select %p146, %s17, 1
        %s148 = smul.addr %s147, 2
        %s149 = smul.addr %s148, 8
        %s150 = scalar_lea.vmem %s0, %s149
        %p151 = pneg %p38
        %p152 = pneg %p35
        %p153 = pneg %p59
        %p154 = pneg %p56
        %p155 = pneg %p80
        %p156 = pneg %p77
        %p157 = pneg %p106
        %p158 = pneg %p103
        %s159 = sand.u32 %s93, 1
        %s160 = scalar_lea.sflag [#allocation3], %s159
        %s161 = sand.u32 %s93, 1
        %s162 = smul.addr %s161, 16
        %s163 = scalar_lea.vmem [#allocation2], %s162
        %p164 = scmp.lt.s32.totalorder %s17, 1
        %s165 = scalar_select %p164, %s17, 1
        %s166 = smul.addr %s165, 2
        %s167 = smul.addr %s166, 8
        %s168 = scalar_lea.vmem %s0, %s167
        %v169 = vld [vmem:[%s168] sm:$0xff]
        %v170 = vld [vmem:[%s168 + $0x8] sm:$0xff]
        %v171 = vld [vmem:[%s1] sm:$0xff]
        %vm172 = vcmask 64512
        %v174 = vsel %vm172, %v169, 0
        %v177 = vsel %vm172, %v170, 0
        %179 = vmatprep.subr.mxu0 0.0
        %180 = vmatpush1.msra.mxu0 %v171
        %181 = vmatprep.subr.mxu0 0.0
        %182 = vmatpush1.msra.mxu0 0.0
        %183 = vmatprep.subr.mxu0 0.0
        %184 = vmatpush1.msra.mxu0 0.0
        %185 = vmatprep.subr.mxu0 0.0
        %186 = vmatpush1.msra.mxu0 0.0
        %187 = vmatprep.subr.mxu0 0.0
        %188 = vmatpush1.msra.mxu0 0.0
        %189 = vmatprep.subr.mxu0 0.0
        %190 = vmatpush1.msra.mxu0 0.0
        %191 = vmatprep.subr.mxu0 0.0
        %192 = vmatpush1.msra.mxu0 0.0
        %193 = vmatprep.subr.mxu0 0.0
        %194 = vmatpush1.msra.mxu0 0.0
        %195 = vmatprep.subr.mxu0 0.0
        %196 = vmatpush1.msra.mxu0 0.0
        %197 = vmatprep.subr.mxu0 0.0
        %198 = vmatpush1.msra.mxu0 0.0
        %199 = vmatprep.subr.mxu0 0.0
        %200 = vmatpush1.msra.mxu0 0.0
        %201 = vmatprep.subr.mxu0 0.0
        %202 = vmatpush1.msra.mxu0 0.0
        %203 = vmatprep.subr.mxu0 0.0
        %204 = vmatpush1.msra.mxu0 0.0
        %205 = vmatprep.subr.mxu0 0.0
        %206 = vmatpush1.msra.mxu0 0.0
        %207 = vmatprep.subr.mxu0 0.0
        %208 = vmatpush1.msra.mxu0 0.0
        %209 = vmatprep.subr.mxu0 0.0
        %210 = vmatpush1.msra.mxu0 0.0
        %211 = vmatprep.subr.mxu0 0.0
        %212 = vmatpush1.msra.mxu0 0.0
        %213 = vmatprep.subr.mxu0 0.0
        %214 = vmatpush1.msra.mxu0 0.0
        %215 = vmatprep.subr.mxu0 0.0
        %216 = vmatpush1.msra.mxu0 0.0
        %217 = vmatprep.subr.mxu0 0.0
        %218 = vmatpush1.msra.mxu0 0.0
        %219 = vmatprep.subr.mxu0 0.0
        %220 = vmatpush1.msra.mxu0 0.0
        %221 = vmatprep.subr.mxu0 0.0
        %222 = vmatpush1.msra.mxu0 0.0
        %223 = vmatprep.subr.mxu0 0.0
        %224 = vmatpush1.msra.mxu0 0.0
        %225 = vmatprep.subr.mxu0 0.0
        %226 = vmatpush1.msra.mxu0 0.0
        %227 = vmatprep.subr.mxu0 0.0
        %228 = vmatpush1.msra.mxu0 0.0
        %229 = vmatprep.subr.mxu0 0.0
        %230 = vmatpush1.msra.mxu0 0.0
        %231 = vmatprep.subr.mxu0 0.0
        %232 = vmatpush1.msra.mxu0 0.0
        %233 = vmatprep.subr.mxu0 0.0
        %234 = vmatpush1.msra.mxu0 0.0
        %235 = vmatprep.subr.mxu0 0.0
        %236 = vmatpush1.msra.mxu0 0.0
        %237 = vmatprep.subr.mxu0 0.0
        %238 = vmatpush1.msra.mxu0 0.0
        %239 = vmatprep.subr.mxu0 0.0
        %240 = vmatpush1.msra.mxu0 0.0
        %241 = vmatprep.subr.mxu0 0.0
        %242 = vmatpush1.msra.mxu0 0.0
        %243 = vmatprep.mubr.f32.mxu0 0.0
        %244 = vmatmul.mubr.f32.gmra.mrb[0].mxu0 %v174
        %v245 = vpop.f32.mrb[0].mxu0
        %v246 = vadd.f32 0.0, %v245
        %v247 = vpop.f32.mrb[0].mxu0
        %248 = vmatprep.mubr.f32.mxu0 0.0
        %249 = vmatmul.mubr.f32.gmra.mrb[0].mxu0 %v177
        %v250 = vpop.f32.mrb[0].mxu0
        %v251 = vadd.f32 0.0, %v250
        %v252 = vpop.f32.mrb[0].mxu0
        %253 = vdwg.mxu0
        %v254 = vld [vmem:[%s2] sm:$0x1]
        %v255 = vld [vmem:[%s2 + $0x1] sm:$0x1]
        %v256 = vlaneseq
        %v257 = vshrl.u32 %v256, 7
        %v258 = vsub.s32 0, %v257
        %v259 = vrot.slane %v254, %v258
        %v260 = vmul.f32 %v246, %v259
        %v261 = vmul.f32 %v251, %v259
        %vm262 = vcmask 130048
        %v263 = vsel %vm262, %v260, 0.0
        %264 = vadd.xlane.f32.xlu0 %v263
        %v265 = vpop.xlane.xlu0 %264
        %v266 = vsel %vm262, %v261, 0.0
        %267 = vadd.xlane.f32.xlu0 %v266
        %v268 = vpop.xlane.xlu0 %267
        %v269 = vlaneseq
        %v270 = vshrl.u32 %v269, 7
        %v271 = vsub.s32 0, %v270
        %v272 = vrot.slane %v255, %v271
        %v273 = vmul.f32 %v246, %v272
        %v274 = vmul.f32 %v251, %v272
        %v275 = vsel %vm262, %v273, 0.0
        %276 = vadd.xlane.f32.xlu0 %v275
        %v277 = vpop.xlane.xlu0 %276
        %v278 = vsel %vm262, %v274, 0.0
        %279 = vadd.xlane.f32.xlu0 %v278
        %v280 = vpop.xlane.xlu0 %279
        %281 = vxpose.xlu0.b32.start [1/16] %v277, 128
        %282 = vxpose.xlu0.b32.cont [2/16] %v280, 128
        %283 = vxpose.xlu0.b32.cont [3/16] 0.0, 128
        %284 = vxpose.xlu0.b32.cont [4/16] 0.0, 128
        %285 = vxpose.xlu0.b32.cont [5/16] 0.0, 128
        %286 = vxpose.xlu0.b32.cont [6/16] 0.0, 128
        %287 = vxpose.xlu0.b32.cont [7/16] 0.0, 128
        %288 = vxpose.xlu0.b32.cont [8/16] 0.0, 128
        %289 = vxpose.xlu0.b32.cont [9/16] 0.0, 128
        %290 = vxpose.xlu0.b32.cont [10/16] 0.0, 128
        %291 = vxpose.xlu0.b32.cont [11/16] 0.0, 128
        %292 = vxpose.xlu0.b32.cont [12/16] 0.0, 128
        %293 = vxpose.xlu0.b32.cont [13/16] 0.0, 128
        %294 = vxpose.xlu0.b32.cont [14/16] 0.0, 128
        %295 = vxpose.xlu0.b32.cont [15/16] 0.0, 128
        %296 = vxpose.xlu0.b32.end [16/16] 0.0, 128
        %v297 = vpop.trf.xlu0
        %v298 = vpop.trf.xlu0
        %v299 = vpop.trf.xlu0
        %v300 = vpop.trf.xlu0
        %v301 = vpop.trf.xlu0
        %v302 = vpop.trf.xlu0
        %v303 = vpop.trf.xlu0
        %v304 = vpop.trf.xlu0
        %v305 = vpop.trf.xlu0
        %v306 = vpop.trf.xlu0
        %v307 = vpop.trf.xlu0
        %v308 = vpop.trf.xlu0
        %v309 = vpop.trf.xlu0
        %v310 = vpop.trf.xlu0
        %v311 = vpop.trf.xlu0
        %v312 = vpop.trf.xlu0
        %v313 = vlaneseq
        %v314 = vshrl.u32 %v313, 7
        %v315 = vsub.s32 0, %v314
        %v316 = vrot.slane %v297, %v315
        %v317 = vadd.f32 %v265, %v316
        %v318 = vadd.f32 %v268, %v316
        %vm319 = vcmp.gt.f32.partialorder %v317, 0.0
        %vm320 = vcmp.gt.f32.partialorder %v318, 0.0
        %v321 = vmul.f32 %v317, 0.2
        %v322 = vmul.f32 %v318, 0.2
        %v323 = vsel %vm319, %v317, %v321
        %v324 = vsel %vm320, %v318, %v322
        %v325 = vxor.u32 %v323, 2147483648
        %v326 = vxor.u32 %v324, 2147483648
        %v327 = vmul.f32 %v325, 1.442695
        %v328 = vpow.pop %v327
        %v329 = vmul.f32 %v326, 1.442695
        %v330 = vpow.pop %v329
        %v331 = vadd.f32 %v328, 1.0
        %v332 = vadd.f32 %v330, 1.0
        %v333 = vrcp.pop %v331
        %v334 = vmul.f32 1.0, %v333
        %v335 = vrcp.pop %v332
        %v336 = vmul.f32 1.0, %v335
        %v337 = vmul.f32 %v334, 1.442695
        %v338 = vpow.pop %v337
        %v339 = vmul.f32 %v336, 1.442695
        %v340 = vpow.pop %v339
        %v341 = vsel %vm262, %v338, 0.0
        %v342 = vsel %vm262, %v340, 0.0
        %v343 = vadd.f32 %v341, %v342
        %v344 = vrot.slane %v343, 4
        %v345 = vadd.f32 %v343, %v344
        %v346 = vrot.slane %v345, 2
        %v347 = vadd.f32 %v345, %v346
        %v348 = vrot.slane %v347, 1
        %v349 = vadd.f32 %v347, %v348
        %v350 = vrcp.pop %v349
        %351 = vxpose.xlu0.b32.start [1/16] %v350, 128
        %352 = vxpose.xlu0.b32.cont [2/16] 0.0, 128
        %353 = vxpose.xlu0.b32.cont [3/16] 0.0, 128
        %354 = vxpose.xlu0.b32.cont [4/16] 0.0, 128
        %355 = vxpose.xlu0.b32.cont [5/16] 0.0, 128
        %356 = vxpose.xlu0.b32.cont [6/16] 0.0, 128
        %357 = vxpose.xlu0.b32.cont [7/16] 0.0, 128
        %358 = vxpose.xlu0.b32.cont [8/16] 0.0, 128
        %359 = vxpose.xlu0.b32.cont [9/16] 0.0, 128
        %360 = vxpose.xlu0.b32.cont [10/16] 0.0, 128
        %361 = vxpose.xlu0.b32.cont [11/16] 0.0, 128
        %362 = vxpose.xlu0.b32.cont [12/16] 0.0, 128
        %363 = vxpose.xlu0.b32.cont [13/16] 0.0, 128
        %364 = vxpose.xlu0.b32.cont [14/16] 0.0, 128
        %365 = vxpose.xlu0.b32.cont [15/16] 0.0, 128
        %366 = vxpose.xlu0.b32.end [16/16] 0.0, 128
        %v367 = vpop.trf.xlu0
        %v368 = vpop.trf.xlu0
        %v369 = vpop.trf.xlu0
        %v370 = vpop.trf.xlu0
        %v371 = vpop.trf.xlu0
        %v372 = vpop.trf.xlu0
        %v373 = vpop.trf.xlu0
        %v374 = vpop.trf.xlu0
        %v375 = vpop.trf.xlu0
        %v376 = vpop.trf.xlu0
        %v377 = vpop.trf.xlu0
        %v378 = vpop.trf.xlu0
        %v379 = vpop.trf.xlu0
        %v380 = vpop.trf.xlu0
        %v381 = vpop.trf.xlu0
        %v382 = vpop.trf.xlu0
        %384 = vset.pattern.permute.xlu0 0
        %385 = vperm.xlu0 %384, %v367
        %v386 = vpop.permute.xlu0 %385
        %389 = vset.pattern.permute.xlu0 0
        %390 = vperm.xlu0 %389, %v368
        %v391 = vpop.permute.xlu0 %390
        %v393 = vmul.f32 %v246, %v386
        %v394 = vmul.f32 %v251, %v391
        %v396 = vsel %vm262, %v338, 0
        %v399 = vsel %vm262, %v340, 0
        %401 = vmatprep.subr.mxu0 0.0
        %402 = vmatpush1.msra.mxu0 %v393
        %403 = vmatprep.subr.mxu0 0.0
        %404 = vmatpush1.msra.mxu0 %v394
        %405 = vmatprep.subr.mxu0 0.0
        %406 = vmatpush1.msra.mxu0 0.0
        %407 = vmatprep.subr.mxu0 0.0
        %408 = vmatpush1.msra.mxu0 0.0
        %409 = vmatprep.subr.mxu0 0.0
        %410 = vmatpush1.msra.mxu0 0.0
        %411 = vmatprep.subr.mxu0 0.0
        %412 = vmatpush1.msra.mxu0 0.0
        %413 = vmatprep.subr.mxu0 0.0
        %414 = vmatpush1.msra.mxu0 0.0
        %415 = vmatprep.subr.mxu0 0.0
        %416 = vmatpush1.msra.mxu0 0.0
        %417 = vmatprep.subr.mxu0 0.0
        %418 = vmatpush1.msra.mxu0 0.0
        %419 = vmatprep.subr.mxu0 0.0
        %420 = vmatpush1.msra.mxu0 0.0
        %421 = vmatprep.subr.mxu0 0.0
        %422 = vmatpush1.msra.mxu0 0.0
        %423 = vmatprep.subr.mxu0 0.0
        %424 = vmatpush1.msra.mxu0 0.0
        %425 = vmatprep.subr.mxu0 0.0
        %426 = vmatpush1.msra.mxu0 0.0
        %427 = vmatprep.subr.mxu0 0.0
        %428 = vmatpush1.msra.mxu0 0.0
        %429 = vmatprep.subr.mxu0 0.0
        %430 = vmatpush1.msra.mxu0 0.0
        %431 = vmatprep.subr.mxu0 0.0
        %432 = vmatpush1.msra.mxu0 0.0
        %433 = vmatprep.subr.mxu0 0.0
        %434 = vmatpush1.msra.mxu0 0.0
        %435 = vmatprep.subr.mxu0 0.0
        %436 = vmatpush1.msra.mxu0 0.0
        %437 = vmatprep.subr.mxu0 0.0
        %438 = vmatpush1.msra.mxu0 0.0
        %439 = vmatprep.subr.mxu0 0.0
        %440 = vmatpush1.msra.mxu0 0.0
        %441 = vmatprep.subr.mxu0 0.0
        %442 = vmatpush1.msra.mxu0 0.0
        %443 = vmatprep.subr.mxu0 0.0
        %444 = vmatpush1.msra.mxu0 0.0
        %445 = vmatprep.subr.mxu0 0.0
        %446 = vmatpush1.msra.mxu0 0.0
        %447 = vmatprep.subr.mxu0 0.0
        %448 = vmatpush1.msra.mxu0 0.0
        %449 = vmatprep.subr.mxu0 0.0
        %450 = vmatpush1.msra.mxu0 0.0
        %451 = vmatprep.subr.mxu0 0.0
        %452 = vmatpush1.msra.mxu0 0.0
        %453 = vmatprep.subr.mxu0 0.0
        %454 = vmatpush1.msra.mxu0 0.0
        %455 = vmatprep.subr.mxu0 0.0
        %456 = vmatpush1.msra.mxu0 0.0
        %457 = vmatprep.subr.mxu0 0.0
        %458 = vmatpush1.msra.mxu0 0.0
        %459 = vmatprep.subr.mxu0 0.0
        %460 = vmatpush1.msra.mxu0 0.0
        %461 = vmatprep.subr.mxu0 0.0
        %462 = vmatpush1.msra.mxu0 0.0
        %463 = vmatprep.subr.mxu0 0.0
        %464 = vmatpush1.msra.mxu0 0.0
        %465 = vmatprep.mubr.f32.mxu0 0.0
        %466 = vmatmul.mubr.f32.gmra.mrb[0].mxu0 %v396
        %v467 = vpop.f32.mrb[0].mxu0
        %v468 = vadd.f32 0.0, %v467
        %v469 = vpop.f32.mrb[0].mxu0
        %470 = vmatprep.mubr.f32.mxu0 0.0
        %471 = vmatmul.mubr.f32.gmra.mrb[0].mxu0 %v399
        %v472 = vpop.f32.mrb[0].mxu0
        %v473 = vadd.f32 0.0, %v472
        %v474 = vpop.f32.mrb[0].mxu0
        %475 = vdwg.mxu0
        %vm476 = vcmp.gt.f32.partialorder %v468, 0.0
        %vm477 = vcmp.gt.f32.partialorder %v473, 0.0
        %v478 = vmin.f32 %v468, 0.0
        %v479 = vmin.f32 %v473, 0.0
        %v480 = vmul.f32 %v478, 1.442695
        %v481 = vpow.pop %v480
        %v482 = vmul.f32 %v479, 1.442695
        %v483 = vpow.pop %v482
        %v484 = vsub.f32 %v481, 1.0
        %v485 = vsub.f32 %v483, 1.0
        %v486 = vsel %vm476, %v468, %v484
        %v487 = vsel %vm477, %v473, %v485
        %488 = vst.msk [vmem:[%s163] sm:$0xff] %vm262, %v486
        %489 = vst.msk [vmem:[%s163 + $0x8] sm:$0xff] %vm262, %v487
        %s490 = sand.u32 %s93, 1
        %s491 = scalar_lea.sflag [#allocation3], %s490
        %s492 = sand.u32 %s93, 1
        %s493 = smul.addr %s492, 16
        %s494 = scalar_lea.vmem [#allocation2], %s493
        // Predicated region
        $region33: #{tpu_custom_call.1} parent=31 // pred_check
          %p495 = pneg %p103
        $region34: #{tpu_custom_call.1} parent=31 // pred_check_branch
          %497 = sbr.rel (%p495) target = $region36
        $region35: #{tpu_custom_call.1} parent=31 // pred_region
          %s499 = ssub.s32 256, 256
          %500 = vsyncadd %s491, %s499
          %s501 = smul.addr %s17, 2
          %s502 = smul.addr %s501, 128
          %s503 = scalar_lea.hbm %s3, %s502
          %s504 = sshll.u32 %s494, 4
          %s505 = int_to_ptr.vmem [resolvable:$true] %s504
          %510 = dma.vmem_to_hbm [thread:$0]  %s505, 256, %s503, %s491, 128, 128, 8
        $region36: #{tpu_custom_call.1} parent=31 // pred_fallthru
          _
      $region32: #{tpu_custom_call.1} parent=5 // pred_fallthru
        _
      %p511 = scmp.le.s32.totalorder 2, %s12
      // Predicated region
      $region37: #{tpu_custom_call.1} parent=5 // pred_check
        %p512 = pneg %p511
      $region38: #{tpu_custom_call.1} parent=5 // pred_check_branch
        %514 = sbr.rel (%p512) target = $region40
      $region39: #{tpu_custom_call.1} parent=5 // pred_region
        %s515 = ssub.s32 %s12, 2
        // Predicated region
        $region41: #{tpu_custom_call.1} parent=39 // pred_check
          %p516 = pneg %p109
        $region42: #{tpu_custom_call.1} parent=39 // pred_check_branch
          %518 = sbr.rel (%p516) target = $region44
        $region43: #{tpu_custom_call.1} parent=39 // pred_region
          %s519 = sand.u32 %s94, 1
          %s520 = scalar_lea.sflag [#allocation3], %s519
          %s521 = sand.u32 %s94, 1
          %s522 = smul.addr %s521, 16
          %s523 = scalar_lea.vmem [#allocation2], %s522
          %524 = dma.done %s520, 256
        $region44: #{tpu_custom_call.1} parent=39 // pred_fallthru
          _
      $region40: #{tpu_custom_call.1} parent=5 // pred_fallthru
        _
    $region6: #{tpu_custom_call.1} parent=1 // loop_footer
      %s16 = sadd.s32 1, %s12
    $region7: #{tpu_custom_call.1} parent=1 // loop_footer_branch
      %11 = sbr.rel target = $region3
    $region8: #{tpu_custom_call.1} parent=1 // loop_exit
      _
    %525 = vsyncpa [#allocation3], 1
    %s526 = scalar_lea.sflag [#allocation3], 1
    %527 = vsyncpa %s526, 1

</llo_original>
